<compile_context>
chip_gen: v5e
topology: v5e:2x2
jax: 0.10.0
libtpu: 0.0.40
codegen_flags: <defaults>
</compile_context>

<pallas_src>
import math
import numpy as np

import jax
import jax.numpy as jnp
from jax import lax
from jax.experimental import pallas as pl
from jax.experimental.pallas import tpu as pltpu


def _round_up(n, m):
    return -(-n // m) * m


def bigru_kernel(x_ref, wpack_ref, sel_ref, out_ref):
    # x_ref:     (T*2B, KI)  block t rows [0,B)=[x[t],0,1,0,..], rows [B,2B)=[0,x[T-1-t],0,1,..]
    # wpack_ref: (KI + round_up(H,8) + round_up(2B,8), LANES) packed weights:
    #              rows [0, KI)               cols [0, 3H)           : stacked W_ih^T + folded biases
    #              rows [KI, KI+H)            cols [0,3H)+[128,128+3H): W_hh_f^T | W_hh_b^T (lane 128)
    #              rows [KI+rup(H), ..+2B)    cols [0, H)            : b_hn rows (fwd batch / bwd batch)
    # sel_ref:   (2T, T*2B)  constant batch-mean + backward-time-reorder selector
    # out_ref:   (T, 2H)
    T2, TB2 = sel_ref.shape
    T = T2 // 2
    B2 = TB2 // T
    B = B2 // 2
    H = out_ref.shape[1] // 2
    KI = x_ref.shape[1]
    off_b = _round_up(3 * H, 128)          # lane offset of the backward W_hh block
    rows_whh = _round_up(H, 8)

    wih = wpack_ref[0:KI, 0:3 * H]                               # (KI, 3H)
    whh = wpack_ref[KI:KI + H, :]                                # (H, LANES)
    bhh_n = wpack_ref[KI + rows_whh:KI + rows_whh + B2, 0:H]     # (2B, H)

    # --- Hoisted input projection: ONE MXU pass covers both directions, all T
    #     steps, and all folded biases (direction select pre-baked into x_ref).
    gi = jnp.dot(x_ref[...], wih, preferred_element_type=jnp.float32)   # (T*2B, 3H)

    # Direction mask, broadcast hoisted out of the unrolled loop.
    is_fwd = lax.broadcasted_iota(jnp.int32, (B2, 1), 0) < B
    mask3h = jnp.broadcast_to(is_fwd, (B2, 3 * H))

    h = jnp.zeros((B2, H), jnp.float32)    # stacked [h_fwd(t); h_bwd(T-1-t)]
    th_steps = []
    for t in range(T):                     # static trip count -> fully unrolled
        a = gi[t * B2:(t + 1) * B2, :]     # precomputed gate pre-activations
        # One recurrent matmul per step (both directions in one 256-lane push
        # on v6e/v7x); pick the right half per row with one lane-aligned select.
        gh_all = jnp.dot(h, whh, preferred_element_type=jnp.float32)    # (2B, LANES)
        gh = jnp.where(mask3h, gh_all[:, :3 * H], gh_all[:, off_b:off_b + 3 * H])
        rz = jax.nn.sigmoid(a[:, :2 * H] + gh[:, :2 * H])               # one EUP pass
        r = rz[:, :H]
        z = rz[:, H:]
        # n-gate: b_hn must stay inside r*(...) -> cannot fuse with the rz add.
        n = jnp.tanh(a[:, 2 * H:] + r * (gh[:, 2 * H:] + bhh_n))
        h = (1.0 - z) * n + z * h
        # Output tanh done per step: hides under the next step's matmul latency.
        th_steps.append(jnp.tanh(h))

    # tanh -> Dropout(eval: identity) -> permute(0,2,1) -> AdaptiveAvgPool1d(1):
    # batch-mean of tanh(output) per time step.  One constant selector matmul
    # does the mean and undoes the backward stream's time reversal; single store.
    th = jnp.concatenate(th_steps, axis=0)                               # (T*2B, H)
    pooled = jnp.dot(sel_ref[...], th, preferred_element_type=jnp.float32)  # (2T, H)
    out_ref[...] = jnp.concatenate([pooled[:T, :], pooled[T:, :]], axis=1)
    # TODO(synk): training-mode Dropout(0.5) (PyTorch RNG mask) is not reproduced.


def bigru_forward(x, params):
    T, B, I = x.shape
    H = params["weight_hh_l0"].shape[1]
    B2 = 2 * B
    KI = _round_up(2 * I + 2, 8)           # [x_f | x_b | 1_f | 1_b | pad]
    off_b = _round_up(3 * H, 128)
    lanes = _round_up(off_b + 3 * H, 128)
    rows_whh = _round_up(H, 8)
    rows_bhn = _round_up(B2, 8)

    def fold_bias(bih, bhh):
        # b_ih (all gates) + b_hh (r,z gates only); b_hn handled separately.
        return jnp.concatenate([bih[:2 * H] + bhh[:2 * H], bih[2 * H:]])

    # --- Augmented input: direction routing + bias "1" columns baked in.
    x_aug = jnp.zeros((T, B2, KI), jnp.float32)
    x_aug = x_aug.at[:, :B, :I].set(x)
    x_aug = x_aug.at[:, B:, I:2 * I].set(x[::-1])
    x_aug = x_aug.at[:, :B, 2 * I].set(1.0)
    x_aug = x_aug.at[:, B:, 2 * I + 1].set(1.0)
    x_aug = x_aug.reshape(T * B2, KI)

    # --- Single packed weight slab (one prologue DMA instead of eight).
    wpack = jnp.zeros((KI + rows_whh + rows_bhn, lanes), jnp.float32)
    # input-projection block (rows 0..KI)
    wpack = wpack.at[:I, :3 * H].set(params["weight_ih_l0"].T)
    wpack = wpack.at[I:2 * I, :3 * H].set(params["weight_ih_l0_reverse"].T)
    wpack = wpack.at[2 * I, :3 * H].set(
        fold_bias(params["bias_ih_l0"], params["bias_hh_l0"]))
    wpack = wpack.at[2 * I + 1, :3 * H].set(
        fold_bias(params["bias_ih_l0_reverse"], params["bias_hh_l0_reverse"]))
    # recurrent block: fwd at lane 0, bwd at lane off_b (=128 for H=32)
    wpack = wpack.at[KI:KI + H, :3 * H].set(params["weight_hh_l0"].T)
    wpack = wpack.at[KI:KI + H, off_b:off_b + 3 * H].set(
        params["weight_hh_l0_reverse"].T)
    # n-gate hidden bias rows (fwd batch rows / bwd batch rows)
    bhn_f = jnp.broadcast_to(params["bias_hh_l0"][2 * H:][None, :], (B, H))
    bhn_b = jnp.broadcast_to(params["bias_hh_l0_reverse"][2 * H:][None, :], (B, H))
    wpack = wpack.at[KI + rows_whh:KI + rows_whh + B2, :H].set(
        jnp.concatenate([bhn_f, bhn_b], axis=0))

    # --- Constant selector: batch mean (1/B) + backward-stream time re-order.
    sel_np = np.zeros((2 * T, T * B2), np.float32)
    for t in range(T):
        sel_np[t, t * B2: t * B2 + B] = 1.0 / B
        s = T - 1 - t
        sel_np[T + t, s * B2 + B: s * B2 + 2 * B] = 1.0 / B
    sel = jnp.asarray(sel_np)

    flops = int(2 * T * B2 * KI * 3 * H            # input projection
                + T * 2 * B2 * H * lanes           # recurrent matmuls
                + 2 * (2 * T) * (T * B2) * H)      # pooling selector
    transcendentals = int(T * B2 * 4 * H)          # sigmoid(2H) + tanh(H) + tanh(H)
    bytes_accessed = int(4 * (x_aug.size + wpack.size + sel.size + T * 2 * H))

    vmem = pl.BlockSpec(memory_space=pltpu.MemorySpace.VMEM)
    return pl.pallas_call(
        bigru_kernel,
        out_shape=jax.ShapeDtypeStruct((T, 2 * H), jnp.float32),
        in_specs=[vmem, vmem, vmem],
        out_specs=vmem,
        cost_estimate=pl.CostEstimate(flops=flops,
                                      transcendentals=transcendentals,
                                      bytes_accessed=bytes_accessed),
    )(x_aug, wpack, sel)


def init_params(key, kernel_size=2, input_size=6):
    """Deterministic init mimicking PyTorch GRU's U(-1/sqrt(H), 1/sqrt(H))."""
    H = int(16 * kernel_size)
    k = 1.0 / math.sqrt(H)
    names_shapes = [
        ("weight_ih_l0", (3 * H, input_size)),
        ("weight_hh_l0", (3 * H, H)),
        ("bias_ih_l0", (3 * H,)),
        ("bias_hh_l0", (3 * H,)),
        ("weight_ih_l0_reverse", (3 * H, input_size)),
        ("weight_hh_l0_reverse", (3 * H, H)),
        ("bias_ih_l0_reverse", (3 * H,)),
        ("bias_hh_l0_reverse", (3 * H,)),
    ]
    params = {}
    for name, shape in names_shapes:
        key, sub = jax.random.split(key)
        params[name] = jax.random.uniform(sub, shape, jnp.float32, -k, k)
    return params


def bigru_ref(x, params):
    """Pure-JAX reference of the same forward pass (for correctness check)."""
    T, B, I = x.shape
    H = params["weight_hh_l0"].shape[1]

    def run_dir(xseq, wih, whh, bih, bhh):
        def cell(h, xt):
            gi = xt @ wih.T + bih
            gh = h @ whh.T + bhh
            r = jax.nn.sigmoid(gi[:, :H] + gh[:, :H])
            z = jax.nn.sigmoid(gi[:, H:2 * H] + gh[:, H:2 * H])
            n = jnp.tanh(gi[:, 2 * H:] + r * gh[:, 2 * H:])
            h = (1.0 - z) * n + z * h
            return h, h
        _, hs = lax.scan(cell, jnp.zeros((B, H), jnp.float32), xseq)
        return hs  # (T, B, H)

    of = run_dir(x, params["weight_ih_l0"], params["weight_hh_l0"],
                 params["bias_ih_l0"], params["bias_hh_l0"])
    ob = run_dir(x[::-1], params["weight_ih_l0_reverse"],
                 params["weight_hh_l0_reverse"],
                 params["bias_ih_l0_reverse"], params["bias_hh_l0_reverse"])[::-1]
    out = jnp.tanh(jnp.concatenate([of, ob], axis=-1))  # (T, B, 2H)
    return jnp.mean(out, axis=1)                        # (T, 2H)


if __name__ == "__main__":
    kernel_size = 2                      # -> hidden H = 32
    T, B, I = 8, 4, 6                    # (seq, batch, input=6)
    H = int(16 * kernel_size)

    key = jax.random.PRNGKey(0)
    key, kx, kp = jax.random.split(key, 3)
    x = jax.random.normal(kx, (T, B, I), jnp.float32)
    params = init_params(kp, kernel_size=kernel_size, input_size=I)

    out = jax.block_until_ready(bigru_forward(x, params))
    ref = jax.block_until_ready(bigru_ref(x, params))

    assert out.shape == (T, 2 * H), out.shape
    assert jnp.allclose(out, ref, atol=2e-4, rtol=2e-4), (
        "max abs err = %g" % float(jnp.max(jnp.abs(out - ref))))
    print("KERNEL_OK")
</pallas_src>

<mosaic_0001>
module attributes {stable_mosaic.version = 11 : i64} {
  func.func @bigru_kernel(%arg0: memref<64x16xf32, #tpu.memory_space<vmem>>, %arg1: memref<56x256xf32, #tpu.memory_space<vmem>>, %arg2: memref<16x64xf32, #tpu.memory_space<vmem>>, %arg3: memref<8x64xf32, #tpu.memory_space<vmem>>) attributes {dimension_semantics = [], scalar_prefetch = 0 : i64, scratch_operands = 0 : i64, tpu.core_type = #tpu.core_type<tc>} {
    %c0 = arith.constant 0 : index
    %c0_0 = arith.constant 0 : index
    %0 = vector.load %arg1[%c0, %c0_0] : memref<56x256xf32, #tpu.memory_space<vmem>>, vector<16x96xf32>
    %c16 = arith.constant 16 : index
    %c0_1 = arith.constant 0 : index
    %1 = vector.load %arg1[%c16, %c0_1] : memref<56x256xf32, #tpu.memory_space<vmem>>, vector<32x256xf32>
    %c48 = arith.constant 48 : index
    %c0_2 = arith.constant 0 : index
    %2 = vector.load %arg1[%c48, %c0_2] : memref<56x256xf32, #tpu.memory_space<vmem>>, vector<8x32xf32>
    %c0_3 = arith.constant 0 : index
    %c0_4 = arith.constant 0 : index
    %3 = vector.load %arg0[%c0_3, %c0_4] : memref<64x16xf32, #tpu.memory_space<vmem>>, vector<64x16xf32>
    %cst = arith.constant dense<0.000000e+00> : vector<64x96xf32>
    %4 = tpu.matmul %3, %0, %cst {dimension_numbers = #tpu.dot_dimension_numbers<[1], [0], [0], [1], [0, 0, 1, 1], [], []>} : vector<64x16xf32>, vector<16x96xf32>, vector<64x96xf32> -> vector<64x96xf32>
    %5 = tpu.iota {dimensions = array<i32: 0>} : vector<8x1xi32>
    %c4_i32 = arith.constant 4 : i32
    %6 = vector.broadcast %c4_i32 : i32 to vector<8x1xi32>
    %7 = arith.cmpi slt, %5, %6 : vector<8x1xi32>
    %8 = vector.shape_cast %7 : vector<8x1xi1> to vector<8x1xi1>
    %9 = vector.broadcast %8 : vector<8x1xi1> to vector<8x96xi1>
    %cst_5 = arith.constant 0.000000e+00 : f32
    %10 = vector.broadcast %cst_5 : f32 to vector<8x32xf32>
    %11 = vector.extract_strided_slice %4 {offsets = [0, 0], sizes = [8, 96], strides = [1, 1]} : vector<64x96xf32> to vector<8x96xf32>
    %cst_6 = arith.constant dense<0.000000e+00> : vector<8x256xf32>
    %12 = tpu.matmul %10, %1, %cst_6 {dimension_numbers = #tpu.dot_dimension_numbers<[1], [0], [0], [1], [0, 0, 1, 1], [], []>} : vector<8x32xf32>, vector<32x256xf32>, vector<8x256xf32> -> vector<8x256xf32>
    %13 = vector.extract_strided_slice %12 {offsets = [0, 0], sizes = [8, 96], strides = [1, 1]} : vector<8x256xf32> to vector<8x96xf32>
    %14 = vector.extract_strided_slice %12 {offsets = [0, 128], sizes = [8, 96], strides = [1, 1]} : vector<8x256xf32> to vector<8x96xf32>
    %15 = arith.select %9, %13, %14 : vector<8x96xi1>, vector<8x96xf32>
    %16 = vector.extract_strided_slice %11 {offsets = [0, 0], sizes = [8, 64], strides = [1, 1]} : vector<8x96xf32> to vector<8x64xf32>
    %17 = vector.extract_strided_slice %15 {offsets = [0, 0], sizes = [8, 64], strides = [1, 1]} : vector<8x96xf32> to vector<8x64xf32>
    %18 = arith.addf %16, %17 : vector<8x64xf32>
    %19 = arith.negf %18 : vector<8x64xf32>
    %20 = math.exp %19 : vector<8x64xf32>
    %cst_7 = arith.constant 1.000000e+00 : f32
    %21 = vector.broadcast %cst_7 : f32 to vector<8x64xf32>
    %22 = arith.addf %21, %20 : vector<8x64xf32>
    %23 = arith.divf %21, %22 : vector<8x64xf32>
    %24 = vector.extract_strided_slice %23 {offsets = [0, 0], sizes = [8, 32], strides = [1, 1]} : vector<8x64xf32> to vector<8x32xf32>
    %25 = vector.extract_strided_slice %23 {offsets = [0, 32], sizes = [8, 32], strides = [1, 1]} : vector<8x64xf32> to vector<8x32xf32>
    %26 = vector.extract_strided_slice %11 {offsets = [0, 64], sizes = [8, 32], strides = [1, 1]} : vector<8x96xf32> to vector<8x32xf32>
    %27 = vector.extract_strided_slice %15 {offsets = [0, 64], sizes = [8, 32], strides = [1, 1]} : vector<8x96xf32> to vector<8x32xf32>
    %28 = arith.addf %27, %2 : vector<8x32xf32>
    %29 = arith.mulf %24, %28 : vector<8x32xf32>
    %30 = arith.addf %26, %29 : vector<8x32xf32>
    %31 = math.tanh %30 : vector<8x32xf32>
    %cst_8 = arith.constant 1.000000e+00 : f32
    %32 = vector.broadcast %cst_8 : f32 to vector<8x32xf32>
    %33 = arith.subf %32, %25 : vector<8x32xf32>
    %34 = arith.mulf %33, %31 : vector<8x32xf32>
    %35 = arith.mulf %25, %10 : vector<8x32xf32>
    %36 = arith.addf %34, %35 : vector<8x32xf32>
    %37 = math.tanh %36 : vector<8x32xf32>
    %38 = vector.extract_strided_slice %4 {offsets = [8, 0], sizes = [8, 96], strides = [1, 1]} : vector<64x96xf32> to vector<8x96xf32>
    %cst_9 = arith.constant dense<0.000000e+00> : vector<8x256xf32>
    %39 = tpu.matmul %36, %1, %cst_9 {dimension_numbers = #tpu.dot_dimension_numbers<[1], [0], [0], [1], [0, 0, 1, 1], [], []>} : vector<8x32xf32>, vector<32x256xf32>, vector<8x256xf32> -> vector<8x256xf32>
    %40 = vector.extract_strided_slice %39 {offsets = [0, 0], sizes = [8, 96], strides = [1, 1]} : vector<8x256xf32> to vector<8x96xf32>
    %41 = vector.extract_strided_slice %39 {offsets = [0, 128], sizes = [8, 96], strides = [1, 1]} : vector<8x256xf32> to vector<8x96xf32>
    %42 = arith.select %9, %40, %41 : vector<8x96xi1>, vector<8x96xf32>
    %43 = vector.extract_strided_slice %38 {offsets = [0, 0], sizes = [8, 64], strides = [1, 1]} : vector<8x96xf32> to vector<8x64xf32>
    %44 = vector.extract_strided_slice %42 {offsets = [0, 0], sizes = [8, 64], strides = [1, 1]} : vector<8x96xf32> to vector<8x64xf32>
    %45 = arith.addf %43, %44 : vector<8x64xf32>
    %46 = arith.negf %45 : vector<8x64xf32>
    %47 = math.exp %46 : vector<8x64xf32>
    %cst_10 = arith.constant 1.000000e+00 : f32
    %48 = vector.broadcast %cst_10 : f32 to vector<8x64xf32>
    %49 = arith.addf %48, %47 : vector<8x64xf32>
    %50 = arith.divf %48, %49 : vector<8x64xf32>
    %51 = vector.extract_strided_slice %50 {offsets = [0, 0], sizes = [8, 32], strides = [1, 1]} : vector<8x64xf32> to vector<8x32xf32>
    %52 = vector.extract_strided_slice %50 {offsets = [0, 32], sizes = [8, 32], strides = [1, 1]} : vector<8x64xf32> to vector<8x32xf32>
    %53 = vector.extract_strided_slice %38 {offsets = [0, 64], sizes = [8, 32], strides = [1, 1]} : vector<8x96xf32> to vector<8x32xf32>
    %54 = vector.extract_strided_slice %42 {offsets = [0, 64], sizes = [8, 32], strides = [1, 1]} : vector<8x96xf32> to vector<8x32xf32>
    %55 = arith.addf %54, %2 : vector<8x32xf32>
    %56 = arith.mulf %51, %55 : vector<8x32xf32>
    %57 = arith.addf %53, %56 : vector<8x32xf32>
    %58 = math.tanh %57 : vector<8x32xf32>
    %cst_11 = arith.constant 1.000000e+00 : f32
    %59 = vector.broadcast %cst_11 : f32 to vector<8x32xf32>
    %60 = arith.subf %59, %52 : vector<8x32xf32>
    %61 = arith.mulf %60, %58 : vector<8x32xf32>
    %62 = arith.mulf %52, %36 : vector<8x32xf32>
    %63 = arith.addf %61, %62 : vector<8x32xf32>
    %64 = math.tanh %63 : vector<8x32xf32>
    %65 = vector.extract_strided_slice %4 {offsets = [16, 0], sizes = [8, 96], strides = [1, 1]} : vector<64x96xf32> to vector<8x96xf32>
    %cst_12 = arith.constant dense<0.000000e+00> : vector<8x256xf32>
    %66 = tpu.matmul %63, %1, %cst_12 {dimension_numbers = #tpu.dot_dimension_numbers<[1], [0], [0], [1], [0, 0, 1, 1], [], []>} : vector<8x32xf32>, vector<32x256xf32>, vector<8x256xf32> -> vector<8x256xf32>
    %67 = vector.extract_strided_slice %66 {offsets = [0, 0], sizes = [8, 96], strides = [1, 1]} : vector<8x256xf32> to vector<8x96xf32>
    %68 = vector.extract_strided_slice %66 {offsets = [0, 128], sizes = [8, 96], strides = [1, 1]} : vector<8x256xf32> to vector<8x96xf32>
    %69 = arith.select %9, %67, %68 : vector<8x96xi1>, vector<8x96xf32>
    %70 = vector.extract_strided_slice %65 {offsets = [0, 0], sizes = [8, 64], strides = [1, 1]} : vector<8x96xf32> to vector<8x64xf32>
    %71 = vector.extract_strided_slice %69 {offsets = [0, 0], sizes = [8, 64], strides = [1, 1]} : vector<8x96xf32> to vector<8x64xf32>
    %72 = arith.addf %70, %71 : vector<8x64xf32>
    %73 = arith.negf %72 : vector<8x64xf32>
    %74 = math.exp %73 : vector<8x64xf32>
    %cst_13 = arith.constant 1.000000e+00 : f32
    %75 = vector.broadcast %cst_13 : f32 to vector<8x64xf32>
    %76 = arith.addf %75, %74 : vector<8x64xf32>
    %77 = arith.divf %75, %76 : vector<8x64xf32>
    %78 = vector.extract_strided_slice %77 {offsets = [0, 0], sizes = [8, 32], strides = [1, 1]} : vector<8x64xf32> to vector<8x32xf32>
    %79 = vector.extract_strided_slice %77 {offsets = [0, 32], sizes = [8, 32], strides = [1, 1]} : vector<8x64xf32> to vector<8x32xf32>
    %80 = vector.extract_strided_slice %65 {offsets = [0, 64], sizes = [8, 32], strides = [1, 1]} : vector<8x96xf32> to vector<8x32xf32>
    %81 = vector.extract_strided_slice %69 {offsets = [0, 64], sizes = [8, 32], strides = [1, 1]} : vector<8x96xf32> to vector<8x32xf32>
    %82 = arith.addf %81, %2 : vector<8x32xf32>
    %83 = arith.mulf %78, %82 : vector<8x32xf32>
    %84 = arith.addf %80, %83 : vector<8x32xf32>
    %85 = math.tanh %84 : vector<8x32xf32>
    %cst_14 = arith.constant 1.000000e+00 : f32
    %86 = vector.broadcast %cst_14 : f32 to vector<8x32xf32>
    %87 = arith.subf %86, %79 : vector<8x32xf32>
    %88 = arith.mulf %87, %85 : vector<8x32xf32>
    %89 = arith.mulf %79, %63 : vector<8x32xf32>
    %90 = arith.addf %88, %89 : vector<8x32xf32>
    %91 = math.tanh %90 : vector<8x32xf32>
    %92 = vector.extract_strided_slice %4 {offsets = [24, 0], sizes = [8, 96], strides = [1, 1]} : vector<64x96xf32> to vector<8x96xf32>
    %cst_15 = arith.constant dense<0.000000e+00> : vector<8x256xf32>
    %93 = tpu.matmul %90, %1, %cst_15 {dimension_numbers = #tpu.dot_dimension_numbers<[1], [0], [0], [1], [0, 0, 1, 1], [], []>} : vector<8x32xf32>, vector<32x256xf32>, vector<8x256xf32> -> vector<8x256xf32>
    %94 = vector.extract_strided_slice %93 {offsets = [0, 0], sizes = [8, 96], strides = [1, 1]} : vector<8x256xf32> to vector<8x96xf32>
    %95 = vector.extract_strided_slice %93 {offsets = [0, 128], sizes = [8, 96], strides = [1, 1]} : vector<8x256xf32> to vector<8x96xf32>
    %96 = arith.select %9, %94, %95 : vector<8x96xi1>, vector<8x96xf32>
    %97 = vector.extract_strided_slice %92 {offsets = [0, 0], sizes = [8, 64], strides = [1, 1]} : vector<8x96xf32> to vector<8x64xf32>
    %98 = vector.extract_strided_slice %96 {offsets = [0, 0], sizes = [8, 64], strides = [1, 1]} : vector<8x96xf32> to vector<8x64xf32>
    %99 = arith.addf %97, %98 : vector<8x64xf32>
    %100 = arith.negf %99 : vector<8x64xf32>
    %101 = math.exp %100 : vector<8x64xf32>
    %cst_16 = arith.constant 1.000000e+00 : f32
    %102 = vector.broadcast %cst_16 : f32 to vector<8x64xf32>
    %103 = arith.addf %102, %101 : vector<8x64xf32>
    %104 = arith.divf %102, %103 : vector<8x64xf32>
    %105 = vector.extract_strided_slice %104 {offsets = [0, 0], sizes = [8, 32], strides = [1, 1]} : vector<8x64xf32> to vector<8x32xf32>
    %106 = vector.extract_strided_slice %104 {offsets = [0, 32], sizes = [8, 32], strides = [1, 1]} : vector<8x64xf32> to vector<8x32xf32>
    %107 = vector.extract_strided_slice %92 {offsets = [0, 64], sizes = [8, 32], strides = [1, 1]} : vector<8x96xf32> to vector<8x32xf32>
    %108 = vector.extract_strided_slice %96 {offsets = [0, 64], sizes = [8, 32], strides = [1, 1]} : vector<8x96xf32> to vector<8x32xf32>
    %109 = arith.addf %108, %2 : vector<8x32xf32>
    %110 = arith.mulf %105, %109 : vector<8x32xf32>
    %111 = arith.addf %107, %110 : vector<8x32xf32>
    %112 = math.tanh %111 : vector<8x32xf32>
    %cst_17 = arith.constant 1.000000e+00 : f32
    %113 = vector.broadcast %cst_17 : f32 to vector<8x32xf32>
    %114 = arith.subf %113, %106 : vector<8x32xf32>
    %115 = arith.mulf %114, %112 : vector<8x32xf32>
    %116 = arith.mulf %106, %90 : vector<8x32xf32>
    %117 = arith.addf %115, %116 : vector<8x32xf32>
    %118 = math.tanh %117 : vector<8x32xf32>
    %119 = vector.extract_strided_slice %4 {offsets = [32, 0], sizes = [8, 96], strides = [1, 1]} : vector<64x96xf32> to vector<8x96xf32>
    %cst_18 = arith.constant dense<0.000000e+00> : vector<8x256xf32>
    %120 = tpu.matmul %117, %1, %cst_18 {dimension_numbers = #tpu.dot_dimension_numbers<[1], [0], [0], [1], [0, 0, 1, 1], [], []>} : vector<8x32xf32>, vector<32x256xf32>, vector<8x256xf32> -> vector<8x256xf32>
    %121 = vector.extract_strided_slice %120 {offsets = [0, 0], sizes = [8, 96], strides = [1, 1]} : vector<8x256xf32> to vector<8x96xf32>
    %122 = vector.extract_strided_slice %120 {offsets = [0, 128], sizes = [8, 96], strides = [1, 1]} : vector<8x256xf32> to vector<8x96xf32>
    %123 = arith.select %9, %121, %122 : vector<8x96xi1>, vector<8x96xf32>
    %124 = vector.extract_strided_slice %119 {offsets = [0, 0], sizes = [8, 64], strides = [1, 1]} : vector<8x96xf32> to vector<8x64xf32>
    %125 = vector.extract_strided_slice %123 {offsets = [0, 0], sizes = [8, 64], strides = [1, 1]} : vector<8x96xf32> to vector<8x64xf32>
    %126 = arith.addf %124, %125 : vector<8x64xf32>
    %127 = arith.negf %126 : vector<8x64xf32>
    %128 = math.exp %127 : vector<8x64xf32>
    %cst_19 = arith.constant 1.000000e+00 : f32
    %129 = vector.broadcast %cst_19 : f32 to vector<8x64xf32>
    %130 = arith.addf %129, %128 : vector<8x64xf32>
    %131 = arith.divf %129, %130 : vector<8x64xf32>
    %132 = vector.extract_strided_slice %131 {offsets = [0, 0], sizes = [8, 32], strides = [1, 1]} : vector<8x64xf32> to vector<8x32xf32>
    %133 = vector.extract_strided_slice %131 {offsets = [0, 32], sizes = [8, 32], strides = [1, 1]} : vector<8x64xf32> to vector<8x32xf32>
    %134 = vector.extract_strided_slice %119 {offsets = [0, 64], sizes = [8, 32], strides = [1, 1]} : vector<8x96xf32> to vector<8x32xf32>
    %135 = vector.extract_strided_slice %123 {offsets = [0, 64], sizes = [8, 32], strides = [1, 1]} : vector<8x96xf32> to vector<8x32xf32>
    %136 = arith.addf %135, %2 : vector<8x32xf32>
    %137 = arith.mulf %132, %136 : vector<8x32xf32>
    %138 = arith.addf %134, %137 : vector<8x32xf32>
    %139 = math.tanh %138 : vector<8x32xf32>
    %cst_20 = arith.constant 1.000000e+00 : f32
    %140 = vector.broadcast %cst_20 : f32 to vector<8x32xf32>
    %141 = arith.subf %140, %133 : vector<8x32xf32>
    %142 = arith.mulf %141, %139 : vector<8x32xf32>
    %143 = arith.mulf %133, %117 : vector<8x32xf32>
    %144 = arith.addf %142, %143 : vector<8x32xf32>
    %145 = math.tanh %144 : vector<8x32xf32>
    %146 = vector.extract_strided_slice %4 {offsets = [40, 0], sizes = [8, 96], strides = [1, 1]} : vector<64x96xf32> to vector<8x96xf32>
    %cst_21 = arith.constant dense<0.000000e+00> : vector<8x256xf32>
    %147 = tpu.matmul %144, %1, %cst_21 {dimension_numbers = #tpu.dot_dimension_numbers<[1], [0], [0], [1], [0, 0, 1, 1], [], []>} : vector<8x32xf32>, vector<32x256xf32>, vector<8x256xf32> -> vector<8x256xf32>
    %148 = vector.extract_strided_slice %147 {offsets = [0, 0], sizes = [8, 96], strides = [1, 1]} : vector<8x256xf32> to vector<8x96xf32>
    %149 = vector.extract_strided_slice %147 {offsets = [0, 128], sizes = [8, 96], strides = [1, 1]} : vector<8x256xf32> to vector<8x96xf32>
    %150 = arith.select %9, %148, %149 : vector<8x96xi1>, vector<8x96xf32>
    %151 = vector.extract_strided_slice %146 {offsets = [0, 0], sizes = [8, 64], strides = [1, 1]} : vector<8x96xf32> to vector<8x64xf32>
    %152 = vector.extract_strided_slice %150 {offsets = [0, 0], sizes = [8, 64], strides = [1, 1]} : vector<8x96xf32> to vector<8x64xf32>
    %153 = arith.addf %151, %152 : vector<8x64xf32>
    %154 = arith.negf %153 : vector<8x64xf32>
    %155 = math.exp %154 : vector<8x64xf32>
    %cst_22 = arith.constant 1.000000e+00 : f32
    %156 = vector.broadcast %cst_22 : f32 to vector<8x64xf32>
    %157 = arith.addf %156, %155 : vector<8x64xf32>
    %158 = arith.divf %156, %157 : vector<8x64xf32>
    %159 = vector.extract_strided_slice %158 {offsets = [0, 0], sizes = [8, 32], strides = [1, 1]} : vector<8x64xf32> to vector<8x32xf32>
    %160 = vector.extract_strided_slice %158 {offsets = [0, 32], sizes = [8, 32], strides = [1, 1]} : vector<8x64xf32> to vector<8x32xf32>
    %161 = vector.extract_strided_slice %146 {offsets = [0, 64], sizes = [8, 32], strides = [1, 1]} : vector<8x96xf32> to vector<8x32xf32>
    %162 = vector.extract_strided_slice %150 {offsets = [0, 64], sizes = [8, 32], strides = [1, 1]} : vector<8x96xf32> to vector<8x32xf32>
    %163 = arith.addf %162, %2 : vector<8x32xf32>
    %164 = arith.mulf %159, %163 : vector<8x32xf32>
    %165 = arith.addf %161, %164 : vector<8x32xf32>
    %166 = math.tanh %165 : vector<8x32xf32>
    %cst_23 = arith.constant 1.000000e+00 : f32
    %167 = vector.broadcast %cst_23 : f32 to vector<8x32xf32>
    %168 = arith.subf %167, %160 : vector<8x32xf32>
    %169 = arith.mulf %168, %166 : vector<8x32xf32>
    %170 = arith.mulf %160, %144 : vector<8x32xf32>
    %171 = arith.addf %169, %170 : vector<8x32xf32>
    %172 = math.tanh %171 : vector<8x32xf32>
    %173 = vector.extract_strided_slice %4 {offsets = [48, 0], sizes = [8, 96], strides = [1, 1]} : vector<64x96xf32> to vector<8x96xf32>
    %cst_24 = arith.constant dense<0.000000e+00> : vector<8x256xf32>
    %174 = tpu.matmul %171, %1, %cst_24 {dimension_numbers = #tpu.dot_dimension_numbers<[1], [0], [0], [1], [0, 0, 1, 1], [], []>} : vector<8x32xf32>, vector<32x256xf32>, vector<8x256xf32> -> vector<8x256xf32>
    %175 = vector.extract_strided_slice %174 {offsets = [0, 0], sizes = [8, 96], strides = [1, 1]} : vector<8x256xf32> to vector<8x96xf32>
    %176 = vector.extract_strided_slice %174 {offsets = [0, 128], sizes = [8, 96], strides = [1, 1]} : vector<8x256xf32> to vector<8x96xf32>
    %177 = arith.select %9, %175, %176 : vector<8x96xi1>, vector<8x96xf32>
    %178 = vector.extract_strided_slice %173 {offsets = [0, 0], sizes = [8, 64], strides = [1, 1]} : vector<8x96xf32> to vector<8x64xf32>
    %179 = vector.extract_strided_slice %177 {offsets = [0, 0], sizes = [8, 64], strides = [1, 1]} : vector<8x96xf32> to vector<8x64xf32>
    %180 = arith.addf %178, %179 : vector<8x64xf32>
    %181 = arith.negf %180 : vector<8x64xf32>
    %182 = math.exp %181 : vector<8x64xf32>
    %cst_25 = arith.constant 1.000000e+00 : f32
    %183 = vector.broadcast %cst_25 : f32 to vector<8x64xf32>
    %184 = arith.addf %183, %182 : vector<8x64xf32>
    %185 = arith.divf %183, %184 : vector<8x64xf32>
    %186 = vector.extract_strided_slice %185 {offsets = [0, 0], sizes = [8, 32], strides = [1, 1]} : vector<8x64xf32> to vector<8x32xf32>
    %187 = vector.extract_strided_slice %185 {offsets = [0, 32], sizes = [8, 32], strides = [1, 1]} : vector<8x64xf32> to vector<8x32xf32>
    %188 = vector.extract_strided_slice %173 {offsets = [0, 64], sizes = [8, 32], strides = [1, 1]} : vector<8x96xf32> to vector<8x32xf32>
    %189 = vector.extract_strided_slice %177 {offsets = [0, 64], sizes = [8, 32], strides = [1, 1]} : vector<8x96xf32> to vector<8x32xf32>
    %190 = arith.addf %189, %2 : vector<8x32xf32>
    %191 = arith.mulf %186, %190 : vector<8x32xf32>
    %192 = arith.addf %188, %191 : vector<8x32xf32>
    %193 = math.tanh %192 : vector<8x32xf32>
    %cst_26 = arith.constant 1.000000e+00 : f32
    %194 = vector.broadcast %cst_26 : f32 to vector<8x32xf32>
    %195 = arith.subf %194, %187 : vector<8x32xf32>
    %196 = arith.mulf %195, %193 : vector<8x32xf32>
    %197 = arith.mulf %187, %171 : vector<8x32xf32>
    %198 = arith.addf %196, %197 : vector<8x32xf32>
    %199 = math.tanh %198 : vector<8x32xf32>
    %200 = vector.extract_strided_slice %4 {offsets = [56, 0], sizes = [8, 96], strides = [1, 1]} : vector<64x96xf32> to vector<8x96xf32>
    %cst_27 = arith.constant dense<0.000000e+00> : vector<8x256xf32>
    %201 = tpu.matmul %198, %1, %cst_27 {dimension_numbers = #tpu.dot_dimension_numbers<[1], [0], [0], [1], [0, 0, 1, 1], [], []>} : vector<8x32xf32>, vector<32x256xf32>, vector<8x256xf32> -> vector<8x256xf32>
    %202 = vector.extract_strided_slice %201 {offsets = [0, 0], sizes = [8, 96], strides = [1, 1]} : vector<8x256xf32> to vector<8x96xf32>
    %203 = vector.extract_strided_slice %201 {offsets = [0, 128], sizes = [8, 96], strides = [1, 1]} : vector<8x256xf32> to vector<8x96xf32>
    %204 = arith.select %9, %202, %203 : vector<8x96xi1>, vector<8x96xf32>
    %205 = vector.extract_strided_slice %200 {offsets = [0, 0], sizes = [8, 64], strides = [1, 1]} : vector<8x96xf32> to vector<8x64xf32>
    %206 = vector.extract_strided_slice %204 {offsets = [0, 0], sizes = [8, 64], strides = [1, 1]} : vector<8x96xf32> to vector<8x64xf32>
    %207 = arith.addf %205, %206 : vector<8x64xf32>
    %208 = arith.negf %207 : vector<8x64xf32>
    %209 = math.exp %208 : vector<8x64xf32>
    %cst_28 = arith.constant 1.000000e+00 : f32
    %210 = vector.broadcast %cst_28 : f32 to vector<8x64xf32>
    %211 = arith.addf %210, %209 : vector<8x64xf32>
    %212 = arith.divf %210, %211 : vector<8x64xf32>
    %213 = vector.extract_strided_slice %212 {offsets = [0, 0], sizes = [8, 32], strides = [1, 1]} : vector<8x64xf32> to vector<8x32xf32>
    %214 = vector.extract_strided_slice %212 {offsets = [0, 32], sizes = [8, 32], strides = [1, 1]} : vector<8x64xf32> to vector<8x32xf32>
    %215 = vector.extract_strided_slice %200 {offsets = [0, 64], sizes = [8, 32], strides = [1, 1]} : vector<8x96xf32> to vector<8x32xf32>
    %216 = vector.extract_strided_slice %204 {offsets = [0, 64], sizes = [8, 32], strides = [1, 1]} : vector<8x96xf32> to vector<8x32xf32>
    %217 = arith.addf %216, %2 : vector<8x32xf32>
    %218 = arith.mulf %213, %217 : vector<8x32xf32>
    %219 = arith.addf %215, %218 : vector<8x32xf32>
    %220 = math.tanh %219 : vector<8x32xf32>
    %cst_29 = arith.constant 1.000000e+00 : f32
    %221 = vector.broadcast %cst_29 : f32 to vector<8x32xf32>
    %222 = arith.subf %221, %214 : vector<8x32xf32>
    %223 = arith.mulf %222, %220 : vector<8x32xf32>
    %224 = arith.mulf %214, %198 : vector<8x32xf32>
    %225 = arith.addf %223, %224 : vector<8x32xf32>
    %226 = math.tanh %225 : vector<8x32xf32>
    %227 = tpu.concatenate %37, %64, %91, %118, %145, %172, %199, %226 in 0 : vector<8x32xf32>, vector<8x32xf32>, vector<8x32xf32>, vector<8x32xf32>, vector<8x32xf32>, vector<8x32xf32>, vector<8x32xf32>, vector<8x32xf32> -> vector<64x32xf32>
    %c0_30 = arith.constant 0 : index
    %c0_31 = arith.constant 0 : index
    %228 = vector.load %arg2[%c0_30, %c0_31] : memref<16x64xf32, #tpu.memory_space<vmem>>, vector<16x64xf32>
    %cst_32 = arith.constant dense<0.000000e+00> : vector<16x32xf32>
    %229 = tpu.matmul %228, %227, %cst_32 {dimension_numbers = #tpu.dot_dimension_numbers<[1], [0], [0], [1], [0, 0, 1, 1], [], []>} : vector<16x64xf32>, vector<64x32xf32>, vector<16x32xf32> -> vector<16x32xf32>
    %230 = vector.extract_strided_slice %229 {offsets = [0, 0], sizes = [8, 32], strides = [1, 1]} : vector<16x32xf32> to vector<8x32xf32>
    %231 = vector.extract_strided_slice %229 {offsets = [8, 0], sizes = [8, 32], strides = [1, 1]} : vector<16x32xf32> to vector<8x32xf32>
    %232 = tpu.concatenate %230, %231 in 1 : vector<8x32xf32>, vector<8x32xf32> -> vector<8x64xf32>
    %c0_33 = arith.constant 0 : index
    %c0_34 = arith.constant 0 : index
    %233 = vector.load %arg3[%c0_33, %c0_34] : memref<8x64xf32, #tpu.memory_space<vmem>>, vector<8x64xf32>
    tpu.vector_store %arg3[%c0_33, %c0_34], %232 {strides = array<i32>} : memref<8x64xf32, #tpu.memory_space<vmem>>, vector<8x64xf32>,
    return
  }
}

</mosaic_0001>

<llo_original>
// kernel: tpu_custom_call.1
$region0: #{tpu_custom_call.1}
  #allocation0 [shape = 'u32[]', space=smem, size = 0x4, offset = 0x4, fixed_abs, tag = 'smem constant byte address 0x4 - core index']
  #allocation1 [shape = 'u32[72,128]{1,0:T(1,128)}', space=vmem, size = 0x9000, scoped, tag = 'internal scratch']
  %s0 = inlined_call_operand.vmem [shape: f32[64,16], index: 0, kind: input, shape index: {}]
  %s1 = inlined_call_operand.hbm [shape: f32[56,256], index: 1, kind: input, shape index: {}]
  %s2 = inlined_call_operand.vmem [shape: f32[16,64], index: 2, kind: input, shape index: {}]
  %s3 = inlined_call_operand.hbm [shape: f32[8,64], index: 3, kind: output, shape index: {}]
  %s4 = sld [smem:[#allocation0]]
  $region26: #{tpu_custom_call.1} parent=0
    _
  %s6 = ssub.s32 1, %s4
  %s7 = scalar_select 0, %s6, %s4
  $region1: #{tpu_custom_call.1} parent=0
    #allocation2 [shape = 'u8[57344]{0}', space=vmem, size = 0xe000, scoped, tag = 'input window, operand 1, single buffered']
    #allocation3 [shape = 's32[1]{0}', space=sflag, size = 0x4, scoped, tag = 'scoped memory for tpu_custom_call.1']
    #allocation4 [shape = 's32[1]{0}', space=sflag, size = 0x4, scoped, tag = 'scoped memory for tpu_custom_call.1']
    #allocation5 [shape = 'u8[4096]{0}', space=vmem, size = 0x1000, scoped, tag = 'output window, operand 0, single buffered']
    %8 = vsyncpa [#allocation3], 0
    %9 = vsyncpa [#allocation4], 0
    // Predicated region
    $region2: #{tpu_custom_call.1} parent=1 // pred_check
      _
    $region3: #{tpu_custom_call.1} parent=1 // pred_check_branch
      %11 = sbr.rel (0) target = $region5
    $region4: #{tpu_custom_call.1} parent=1 // pred_region
      _
    $region5: #{tpu_custom_call.1} parent=1 // pred_fallthru
      _
    // Predicated region
    $region6: #{tpu_custom_call.1} parent=1 // pred_check
      _
    $region7: #{tpu_custom_call.1} parent=1 // pred_check_branch
      %13 = sbr.rel (0) target = $region9
    $region8: #{tpu_custom_call.1} parent=1 // pred_region
      %15 = vsyncadd [#allocation3], 0
      %s16 = sshll.u32 %s1, 4
      %s17 = int_to_ptr.hbm [resolvable:$true] %s16
      %s18 = sshll.u32 [#allocation2], 4
      %s19 = int_to_ptr.vmem [resolvable:$true] %s18
      %24 = dma.hbm_to_vmem [thread:$0]  %s17, 1792, %s19, [#allocation3], 256, 256, 16
    $region9: #{tpu_custom_call.1} parent=1 // pred_fallthru
      _
    // Predicated region
    $region10: #{tpu_custom_call.1} parent=1 // pred_check
      _
    $region11: #{tpu_custom_call.1} parent=1 // pred_check_branch
      %26 = sbr.rel (0) target = $region13
    $region12: #{tpu_custom_call.1} parent=1 // pred_region
      _
    $region13: #{tpu_custom_call.1} parent=1 // pred_fallthru
      _
    // Predicated region
    $region14: #{tpu_custom_call.1} parent=1 // pred_check
      _
    $region15: #{tpu_custom_call.1} parent=1 // pred_check_branch
      %28 = sbr.rel (0) target = $region17
    $region16: #{tpu_custom_call.1} parent=1 // pred_region
      %30 = dma.done [#allocation3], 1792
    $region17: #{tpu_custom_call.1} parent=1 // pred_fallthru
      _
    %v31 = vld [vmem:[#allocation2] sm:$0xff]
    %v32 = vld [vmem:[#allocation2 + $0x10] sm:$0xff]
    %v33 = vld [vmem:[#allocation2 + $0x20] sm:$0xff]
    %v34 = vld [vmem:[#allocation2 + $0x28] sm:$0xff]
    %v35 = vld [vmem:[#allocation2 + $0x30] sm:$0xff]
    %v36 = vld [vmem:[#allocation2 + $0x38] sm:$0xff]
    %v37 = vld [vmem:[#allocation2 + $0x40] sm:$0xff]
    %v38 = vld [vmem:[#allocation2 + $0x48] sm:$0xff]
    %v39 = vld [vmem:[#allocation2 + $0x50] sm:$0xff]
    %v40 = vld [vmem:[#allocation2 + $0x58] sm:$0xff]
    %v41 = vld [vmem:[#allocation2 + $0x60] sm:$0xff]
    %v42 = vld [vmem:[%s0] sm:$0xff]
    %v43 = vld [vmem:[%s0 + $0x8] sm:$0xff]
    %v44 = vld [vmem:[%s0 + $0x10] sm:$0xff]
    %v45 = vld [vmem:[%s0 + $0x18] sm:$0xff]
    %v46 = vld [vmem:[%s0 + $0x20] sm:$0xff]
    %v47 = vld [vmem:[%s0 + $0x28] sm:$0xff]
    %v48 = vld [vmem:[%s0 + $0x30] sm:$0xff]
    %v49 = vld [vmem:[%s0 + $0x38] sm:$0xff]
    %vm50 = vcmask 130048
    %v52 = vsel %vm50, %v42, 0
    %v55 = vsel %vm50, %v43, 0
    %v58 = vsel %vm50, %v44, 0
    %v61 = vsel %vm50, %v45, 0
    %v64 = vsel %vm50, %v46, 0
    %v67 = vsel %vm50, %v47, 0
    %v70 = vsel %vm50, %v48, 0
    %v73 = vsel %vm50, %v49, 0
    %75 = vmatpush.msra.mxu0 0.0
    %76 = vmatpush.msra.mxu0 0.0
    %77 = vmatpush.msra.mxu0 0.0
    %78 = vmatpush.msra.mxu0 0.0
    %79 = vmatpush.msra.mxu0 0.0
    %80 = vmatpush.msra.mxu0 0.0
    %81 = vmatpush.msra.mxu0 0.0
    %82 = vmatpush.msra.mxu0 0.0
    %83 = vmatpush.msra.mxu0 0.0
    %84 = vmatpush.msra.mxu0 0.0
    %85 = vmatpush.msra.mxu0 0.0
    %86 = vmatpush.msra.mxu0 0.0
    %87 = vmatpush.msra.mxu0 0.0
    %88 = vmatpush.msra.mxu0 0.0
    %89 = vmatpush.msra.mxu0 %v32
    %90 = vmatpush.msra.mxu0 %v31
    %91 = vmatmul.f32.gmra.mxu0 %v52
    %v92 = vpop.f32.mrf.mxu0
    %v93 = vadd.f32 0.0, %v92
    %94 = vmatmul.f32.gmra.mxu0 %v55
    %v95 = vpop.f32.mrf.mxu0
    %v96 = vadd.f32 0.0, %v95
    %97 = vmatmul.f32.gmra.mxu0 %v58
    %v98 = vpop.f32.mrf.mxu0
    %v99 = vadd.f32 0.0, %v98
    %100 = vmatmul.f32.gmra.mxu0 %v61
    %v101 = vpop.f32.mrf.mxu0
    %v102 = vadd.f32 0.0, %v101
    %103 = vmatmul.f32.gmra.mxu0 %v64
    %v104 = vpop.f32.mrf.mxu0
    %v105 = vadd.f32 0.0, %v104
    %106 = vmatmul.f32.gmra.mxu0 %v67
    %v107 = vpop.f32.mrf.mxu0
    %v108 = vadd.f32 0.0, %v107
    %109 = vmatmul.f32.gmra.mxu0 %v70
    %v110 = vpop.f32.mrf.mxu0
    %v111 = vadd.f32 0.0, %v110
    %112 = vmatmul.f32.gmra.mxu0 %v73
    %v113 = vpop.f32.mrf.mxu0
    %v114 = vadd.f32 0.0, %v113
    %115 = vdwg.mxu0
    %v116 = vlaneseq
    %v117 = vshrl.u32 %v116, 7
    %vm118 = vcmp.lt.s32.totalorder %v117, 4
    %v119 = vsel %vm118, 1, 0
    %vm120 = vcmp.eq.s32.totalorder %v119, 1
    %vm121 = vcmask 261120
    %v123 = vsel %vm121, 0.0, 0
    %125 = vmatpush.msra.mxu0 0.0
    %126 = vmatpush.msra.mxu0 0.0
    %127 = vmatpush.msra.mxu0 0.0
    %128 = vmatpush.msra.mxu0 0.0
    %129 = vmatpush.msra.mxu0 0.0
    %130 = vmatpush.msra.mxu0 0.0
    %131 = vmatpush.msra.mxu0 0.0
    %132 = vmatpush.msra.mxu0 0.0
    %133 = vmatpush.msra.mxu0 0.0
    %134 = vmatpush.msra.mxu0 0.0
    %135 = vmatpush.msra.mxu0 0.0
    %136 = vmatpush.msra.mxu0 0.0
    %137 = vmatpush.msra.mxu0 %v39
    %138 = vmatpush.msra.mxu0 %v37
    %139 = vmatpush.msra.mxu0 %v35
    %140 = vmatpush.msra.mxu0 %v33
    %141 = vmatmul.f32.gmra.mxu0 %v123
    %v142 = vpop.f32.mrf.mxu0
    %v143 = vadd.f32 0.0, %v142
    %144 = vdwg.mxu0
    %145 = vmatpush.msra.mxu0 0.0
    %146 = vmatpush.msra.mxu0 0.0
    %147 = vmatpush.msra.mxu0 0.0
    %148 = vmatpush.msra.mxu0 0.0
    %149 = vmatpush.msra.mxu0 0.0
    %150 = vmatpush.msra.mxu0 0.0
    %151 = vmatpush.msra.mxu0 0.0
    %152 = vmatpush.msra.mxu0 0.0
    %153 = vmatpush.msra.mxu0 0.0
    %154 = vmatpush.msra.mxu0 0.0
    %155 = vmatpush.msra.mxu0 0.0
    %156 = vmatpush.msra.mxu0 0.0
    %157 = vmatpush.msra.mxu0 %v40
    %158 = vmatpush.msra.mxu0 %v38
    %159 = vmatpush.msra.mxu0 %v36
    %160 = vmatpush.msra.mxu0 %v34
    %161 = vmatmul.f32.gmra.mxu0 %v123
    %v162 = vpop.f32.mrf.mxu0
    %v163 = vadd.f32 0.0, %v162
    %164 = vdwg.mxu0
    %v165 = vsel %vm120, %v143, %v163
    %v166 = vadd.f32 %v93, %v165
    %v167 = vxor.u32 %v166, 2147483648
    %v168 = vmul.f32 %v167, 1.442695
    %v169 = vpow.pop %v168
    %v170 = vadd.f32 %v169, 1.0
    %v171 = vrcp.pop %v170
    %v172 = vmul.f32 %v170, %v171
    %v173 = vsub.f32 1.0, %v172
    %v174 = vmul.f32 %v171, %v173
    %v175 = vadd.f32 %v171, %v174
    %vm176 = vweird.f32 %v170
    %vm177 = vweird.f32 %v171
    %vm178 = vmor %vm176, %vm177
    %v179 = vsel %vm178, %v171, %v175
    %v180 = vand.u32 2147483647, %v170
    %vm181 = vcmp.eq.f32.partialorder %v180, 8.507059e+37
    %v182 = vand.u32 %v170, 2147483648
    %v183 = vor.u32 1.1754944e-38, %v182
    %v184 = vsel %vm181, %v183, %v179
    %v185 = vmul.f32 1.0, %v184
    %187 = vrot.lane.b32.xlu0 %v41, 64
    %v188 = vpop.permute.xlu0 %187
    %v190 = vadd.f32 %v165, %v188
    %192 = vrot.lane.b32.xlu0 %v190, 64
    %v193 = vpop.permute.xlu0 %192
    %v195 = vmul.f32 %v185, %v193
    %197 = vrot.lane.b32.xlu0 %v195, 64
    %v198 = vpop.permute.xlu0 %197
    %v200 = vadd.f32 %v93, %v198
    %v201 = vtanh.pop %v200
    %v202 = vsub.f32 1.0, %v185
    %204 = vrot.lane.b32.xlu0 %v201, 96
    %v205 = vpop.permute.xlu0 %204
    %v207 = vmul.f32 %v202, %v205
    %v208 = vmul.f32 %v185, 0.0
    %v209 = vadd.f32 %v207, %v208
    %v210 = vtanh.pop %v209
    %212 = vrot.lane.b32.xlu0 %v209, 96
    %v213 = vpop.permute.xlu0 %212
    %v214 = vsel %vm121, %v213, 0
    %216 = vmatpush.msra.mxu0 0.0
    %217 = vmatpush.msra.mxu0 0.0
    %218 = vmatpush.msra.mxu0 0.0
    %219 = vmatpush.msra.mxu0 0.0
    %220 = vmatpush.msra.mxu0 0.0
    %221 = vmatpush.msra.mxu0 0.0
    %222 = vmatpush.msra.mxu0 0.0
    %223 = vmatpush.msra.mxu0 0.0
    %224 = vmatpush.msra.mxu0 0.0
    %225 = vmatpush.msra.mxu0 0.0
    %226 = vmatpush.msra.mxu0 0.0
    %227 = vmatpush.msra.mxu0 0.0
    %228 = vmatpush.msra.mxu0 %v39
    %229 = vmatpush.msra.mxu0 %v37
    %230 = vmatpush.msra.mxu0 %v35
    %231 = vmatpush.msra.mxu0 %v33
    %232 = vmatmul.f32.gmra.mxu0 %v214
    %v233 = vpop.f32.mrf.mxu0
    %v234 = vadd.f32 0.0, %v233
    %235 = vdwg.mxu0
    %236 = vmatpush.msra.mxu0 0.0
    %237 = vmatpush.msra.mxu0 0.0
    %238 = vmatpush.msra.mxu0 0.0
    %239 = vmatpush.msra.mxu0 0.0
    %240 = vmatpush.msra.mxu0 0.0
    %241 = vmatpush.msra.mxu0 0.0
    %242 = vmatpush.msra.mxu0 0.0
    %243 = vmatpush.msra.mxu0 0.0
    %244 = vmatpush.msra.mxu0 0.0
    %245 = vmatpush.msra.mxu0 0.0
    %246 = vmatpush.msra.mxu0 0.0
    %247 = vmatpush.msra.mxu0 0.0
    %248 = vmatpush.msra.mxu0 %v40
    %249 = vmatpush.msra.mxu0 %v38
    %250 = vmatpush.msra.mxu0 %v36
    %251 = vmatpush.msra.mxu0 %v34
    %252 = vmatmul.f32.gmra.mxu0 %v214
    %v253 = vpop.f32.mrf.mxu0
    %v254 = vadd.f32 0.0, %v253
    %255 = vdwg.mxu0
    %v256 = vsel %vm120, %v234, %v254
    %v257 = vadd.f32 %v96, %v256
    %v258 = vxor.u32 %v257, 2147483648
    %v259 = vmul.f32 %v258, 1.442695
    %v260 = vpow.pop %v259
    %v261 = vadd.f32 %v260, 1.0
    %v262 = vrcp.pop %v261
    %v263 = vmul.f32 %v261, %v262
    %v264 = vsub.f32 1.0, %v263
    %v265 = vmul.f32 %v262, %v264
    %v266 = vadd.f32 %v262, %v265
    %vm267 = vweird.f32 %v261
    %vm268 = vweird.f32 %v262
    %vm269 = vmor %vm267, %vm268
    %v270 = vsel %vm269, %v262, %v266
    %v271 = vand.u32 2147483647, %v261
    %vm272 = vcmp.eq.f32.partialorder %v271, 8.507059e+37
    %v273 = vand.u32 %v261, 2147483648
    %v274 = vor.u32 1.1754944e-38, %v273
    %v275 = vsel %vm272, %v274, %v270
    %v276 = vmul.f32 1.0, %v275
    %v277 = vadd.f32 %v256, %v188
    %279 = vrot.lane.b32.xlu0 %v277, 64
    %v280 = vpop.permute.xlu0 %279
    %v282 = vmul.f32 %v276, %v280
    %284 = vrot.lane.b32.xlu0 %v282, 64
    %v285 = vpop.permute.xlu0 %284
    %v287 = vadd.f32 %v96, %v285
    %v288 = vtanh.pop %v287
    %v289 = vsub.f32 1.0, %v276
    %291 = vrot.lane.b32.xlu0 %v288, 96
    %v292 = vpop.permute.xlu0 %291
    %v294 = vmul.f32 %v289, %v292
    %v295 = vmul.f32 %v276, %v209
    %v296 = vadd.f32 %v294, %v295
    %v297 = vtanh.pop %v296
    %299 = vrot.lane.b32.xlu0 %v296, 96
    %v300 = vpop.permute.xlu0 %299
    %v301 = vsel %vm121, %v300, 0
    %303 = vmatpush.msra.mxu0 0.0
    %304 = vmatpush.msra.mxu0 0.0
    %305 = vmatpush.msra.mxu0 0.0
    %306 = vmatpush.msra.mxu0 0.0
    %307 = vmatpush.msra.mxu0 0.0
    %308 = vmatpush.msra.mxu0 0.0
    %309 = vmatpush.msra.mxu0 0.0
    %310 = vmatpush.msra.mxu0 0.0
    %311 = vmatpush.msra.mxu0 0.0
    %312 = vmatpush.msra.mxu0 0.0
    %313 = vmatpush.msra.mxu0 0.0
    %314 = vmatpush.msra.mxu0 0.0
    %315 = vmatpush.msra.mxu0 %v39
    %316 = vmatpush.msra.mxu0 %v37
    %317 = vmatpush.msra.mxu0 %v35
    %318 = vmatpush.msra.mxu0 %v33
    %319 = vmatmul.f32.gmra.mxu0 %v301
    %v320 = vpop.f32.mrf.mxu0
    %v321 = vadd.f32 0.0, %v320
    %322 = vdwg.mxu0
    %323 = vmatpush.msra.mxu0 0.0
    %324 = vmatpush.msra.mxu0 0.0
    %325 = vmatpush.msra.mxu0 0.0
    %326 = vmatpush.msra.mxu0 0.0
    %327 = vmatpush.msra.mxu0 0.0
    %328 = vmatpush.msra.mxu0 0.0
    %329 = vmatpush.msra.mxu0 0.0
    %330 = vmatpush.msra.mxu0 0.0
    %331 = vmatpush.msra.mxu0 0.0
    %332 = vmatpush.msra.mxu0 0.0
    %333 = vmatpush.msra.mxu0 0.0
    %334 = vmatpush.msra.mxu0 0.0
    %335 = vmatpush.msra.mxu0 %v40
    %336 = vmatpush.msra.mxu0 %v38
    %337 = vmatpush.msra.mxu0 %v36
    %338 = vmatpush.msra.mxu0 %v34
    %339 = vmatmul.f32.gmra.mxu0 %v301
    %v340 = vpop.f32.mrf.mxu0
    %v341 = vadd.f32 0.0, %v340
    %342 = vdwg.mxu0
    %v343 = vsel %vm120, %v321, %v341
    %v344 = vadd.f32 %v99, %v343
    %v345 = vxor.u32 %v344, 2147483648
    %v346 = vmul.f32 %v345, 1.442695
    %v347 = vpow.pop %v346
    %v348 = vadd.f32 %v347, 1.0
    %v349 = vrcp.pop %v348
    %v350 = vmul.f32 %v348, %v349
    %v351 = vsub.f32 1.0, %v350
    %v352 = vmul.f32 %v349, %v351
    %v353 = vadd.f32 %v349, %v352
    %vm354 = vweird.f32 %v348
    %vm355 = vweird.f32 %v349
    %vm356 = vmor %vm354, %vm355
    %v357 = vsel %vm356, %v349, %v353
    %v358 = vand.u32 2147483647, %v348
    %vm359 = vcmp.eq.f32.partialorder %v358, 8.507059e+37
    %v360 = vand.u32 %v348, 2147483648
    %v361 = vor.u32 1.1754944e-38, %v360
    %v362 = vsel %vm359, %v361, %v357
    %v363 = vmul.f32 1.0, %v362
    %v364 = vadd.f32 %v343, %v188
    %366 = vrot.lane.b32.xlu0 %v364, 64
    %v367 = vpop.permute.xlu0 %366
    %v369 = vmul.f32 %v363, %v367
    %371 = vrot.lane.b32.xlu0 %v369, 64
    %v372 = vpop.permute.xlu0 %371
    %v374 = vadd.f32 %v99, %v372
    %v375 = vtanh.pop %v374
    %v376 = vsub.f32 1.0, %v363
    %378 = vrot.lane.b32.xlu0 %v375, 96
    %v379 = vpop.permute.xlu0 %378
    %v381 = vmul.f32 %v376, %v379
    %v382 = vmul.f32 %v363, %v296
    %v383 = vadd.f32 %v381, %v382
    %v384 = vtanh.pop %v383
    %386 = vrot.lane.b32.xlu0 %v383, 96
    %v387 = vpop.permute.xlu0 %386
    %v388 = vsel %vm121, %v387, 0
    %390 = vmatpush.msra.mxu0 0.0
    %391 = vmatpush.msra.mxu0 0.0
    %392 = vmatpush.msra.mxu0 0.0
    %393 = vmatpush.msra.mxu0 0.0
    %394 = vmatpush.msra.mxu0 0.0
    %395 = vmatpush.msra.mxu0 0.0
    %396 = vmatpush.msra.mxu0 0.0
    %397 = vmatpush.msra.mxu0 0.0
    %398 = vmatpush.msra.mxu0 0.0
    %399 = vmatpush.msra.mxu0 0.0
    %400 = vmatpush.msra.mxu0 0.0
    %401 = vmatpush.msra.mxu0 0.0
    %402 = vmatpush.msra.mxu0 %v39
    %403 = vmatpush.msra.mxu0 %v37
    %404 = vmatpush.msra.mxu0 %v35
    %405 = vmatpush.msra.mxu0 %v33
    %406 = vmatmul.f32.gmra.mxu0 %v388
    %v407 = vpop.f32.mrf.mxu0
    %v408 = vadd.f32 0.0, %v407
    %409 = vdwg.mxu0
    %410 = vmatpush.msra.mxu0 0.0
    %411 = vmatpush.msra.mxu0 0.0
    %412 = vmatpush.msra.mxu0 0.0
    %413 = vmatpush.msra.mxu0 0.0
    %414 = vmatpush.msra.mxu0 0.0
    %415 = vmatpush.msra.mxu0 0.0
    %416 = vmatpush.msra.mxu0 0.0
    %417 = vmatpush.msra.mxu0 0.0
    %418 = vmatpush.msra.mxu0 0.0
    %419 = vmatpush.msra.mxu0 0.0
    %420 = vmatpush.msra.mxu0 0.0
    %421 = vmatpush.msra.mxu0 0.0
    %422 = vmatpush.msra.mxu0 %v40
    %423 = vmatpush.msra.mxu0 %v38
    %424 = vmatpush.msra.mxu0 %v36
    %425 = vmatpush.msra.mxu0 %v34
    %426 = vmatmul.f32.gmra.mxu0 %v388
    %v427 = vpop.f32.mrf.mxu0
    %v428 = vadd.f32 0.0, %v427
    %429 = vdwg.mxu0
    %v430 = vsel %vm120, %v408, %v428
    %v431 = vadd.f32 %v102, %v430
    %v432 = vxor.u32 %v431, 2147483648
    %v433 = vmul.f32 %v432, 1.442695
    %v434 = vpow.pop %v433
    %v435 = vadd.f32 %v434, 1.0
    %v436 = vrcp.pop %v435
    %v437 = vmul.f32 %v435, %v436
    %v438 = vsub.f32 1.0, %v437
    %v439 = vmul.f32 %v436, %v438
    %v440 = vadd.f32 %v436, %v439
    %vm441 = vweird.f32 %v435
    %vm442 = vweird.f32 %v436
    %vm443 = vmor %vm441, %vm442
    %v444 = vsel %vm443, %v436, %v440
    %v445 = vand.u32 2147483647, %v435
    %vm446 = vcmp.eq.f32.partialorder %v445, 8.507059e+37
    %v447 = vand.u32 %v435, 2147483648
    %v448 = vor.u32 1.1754944e-38, %v447
    %v449 = vsel %vm446, %v448, %v444
    %v450 = vmul.f32 1.0, %v449
    %v451 = vadd.f32 %v430, %v188
    %453 = vrot.lane.b32.xlu0 %v451, 64
    %v454 = vpop.permute.xlu0 %453
    %v456 = vmul.f32 %v450, %v454
    %458 = vrot.lane.b32.xlu0 %v456, 64
    %v459 = vpop.permute.xlu0 %458
    %v461 = vadd.f32 %v102, %v459
    %v462 = vtanh.pop %v461
    %v463 = vsub.f32 1.0, %v450
    %465 = vrot.lane.b32.xlu0 %v462, 96
    %v466 = vpop.permute.xlu0 %465
    %v468 = vmul.f32 %v463, %v466
    %v469 = vmul.f32 %v450, %v383
    %v470 = vadd.f32 %v468, %v469
    %v471 = vtanh.pop %v470
    %473 = vrot.lane.b32.xlu0 %v470, 96
    %v474 = vpop.permute.xlu0 %473
    %v475 = vsel %vm121, %v474, 0
    %477 = vmatpush.msra.mxu0 0.0
    %478 = vmatpush.msra.mxu0 0.0
    %479 = vmatpush.msra.mxu0 0.0
    %480 = vmatpush.msra.mxu0 0.0
    %481 = vmatpush.msra.mxu0 0.0
    %482 = vmatpush.msra.mxu0 0.0
    %483 = vmatpush.msra.mxu0 0.0
    %484 = vmatpush.msra.mxu0 0.0
    %485 = vmatpush.msra.mxu0 0.0
    %486 = vmatpush.msra.mxu0 0.0
    %487 = vmatpush.msra.mxu0 0.0
    %488 = vmatpush.msra.mxu0 0.0
    %489 = vmatpush.msra.mxu0 %v39
    %490 = vmatpush.msra.mxu0 %v37
    %491 = vmatpush.msra.mxu0 %v35
    %492 = vmatpush.msra.mxu0 %v33
    %493 = vmatmul.f32.gmra.mxu0 %v475
    %v494 = vpop.f32.mrf.mxu0
    %v495 = vadd.f32 0.0, %v494
    %496 = vdwg.mxu0
    %497 = vmatpush.msra.mxu0 0.0
    %498 = vmatpush.msra.mxu0 0.0
    %499 = vmatpush.msra.mxu0 0.0
    %500 = vmatpush.msra.mxu0 0.0
    %501 = vmatpush.msra.mxu0 0.0
    %502 = vmatpush.msra.mxu0 0.0
    %503 = vmatpush.msra.mxu0 0.0
    %504 = vmatpush.msra.mxu0 0.0
    %505 = vmatpush.msra.mxu0 0.0
    %506 = vmatpush.msra.mxu0 0.0
    %507 = vmatpush.msra.mxu0 0.0
    %508 = vmatpush.msra.mxu0 0.0
    %509 = vmatpush.msra.mxu0 %v40
    %510 = vmatpush.msra.mxu0 %v38
    %511 = vmatpush.msra.mxu0 %v36
    %512 = vmatpush.msra.mxu0 %v34
    %513 = vmatmul.f32.gmra.mxu0 %v475
    %v514 = vpop.f32.mrf.mxu0
    %v515 = vadd.f32 0.0, %v514
    %516 = vdwg.mxu0
    %v517 = vsel %vm120, %v495, %v515
    %v518 = vadd.f32 %v105, %v517
    %v519 = vxor.u32 %v518, 2147483648
    %v520 = vmul.f32 %v519, 1.442695
    %v521 = vpow.pop %v520
    %v522 = vadd.f32 %v521, 1.0
    %v523 = vrcp.pop %v522
    %v524 = vmul.f32 %v522, %v523
    %v525 = vsub.f32 1.0, %v524
    %v526 = vmul.f32 %v523, %v525
    %v527 = vadd.f32 %v523, %v526
    %vm528 = vweird.f32 %v522
    %vm529 = vweird.f32 %v523
    %vm530 = vmor %vm528, %vm529
    %v531 = vsel %vm530, %v523, %v527
    %v532 = vand.u32 2147483647, %v522
    %vm533 = vcmp.eq.f32.partialorder %v532, 8.507059e+37
    %v534 = vand.u32 %v522, 2147483648
    %v535 = vor.u32 1.1754944e-38, %v534
    %v536 = vsel %vm533, %v535, %v531
    %v537 = vmul.f32 1.0, %v536
    %v538 = vadd.f32 %v517, %v188
    %540 = vrot.lane.b32.xlu0 %v538, 64
    %v541 = vpop.permute.xlu0 %540
    %v543 = vmul.f32 %v537, %v541
    %545 = vrot.lane.b32.xlu0 %v543, 64
    %v546 = vpop.permute.xlu0 %545
    %v548 = vadd.f32 %v105, %v546
    %v549 = vtanh.pop %v548
    %v550 = vsub.f32 1.0, %v537
    %552 = vrot.lane.b32.xlu0 %v549, 96
    %v553 = vpop.permute.xlu0 %552
    %v555 = vmul.f32 %v550, %v553
    %v556 = vmul.f32 %v537, %v470
    %v557 = vadd.f32 %v555, %v556
    %v558 = vtanh.pop %v557
    %560 = vrot.lane.b32.xlu0 %v557, 96
    %v561 = vpop.permute.xlu0 %560
    %v562 = vsel %vm121, %v561, 0
    %564 = vmatpush.msra.mxu0 0.0
    %565 = vmatpush.msra.mxu0 0.0
    %566 = vmatpush.msra.mxu0 0.0
    %567 = vmatpush.msra.mxu0 0.0
    %568 = vmatpush.msra.mxu0 0.0
    %569 = vmatpush.msra.mxu0 0.0
    %570 = vmatpush.msra.mxu0 0.0
    %571 = vmatpush.msra.mxu0 0.0
    %572 = vmatpush.msra.mxu0 0.0
    %573 = vmatpush.msra.mxu0 0.0
    %574 = vmatpush.msra.mxu0 0.0
    %575 = vmatpush.msra.mxu0 0.0
    %576 = vmatpush.msra.mxu0 %v39
    %577 = vmatpush.msra.mxu0 %v37
    %578 = vmatpush.msra.mxu0 %v35
    %579 = vmatpush.msra.mxu0 %v33
    %580 = vmatmul.f32.gmra.mxu0 %v562
    %v581 = vpop.f32.mrf.mxu0
    %v582 = vadd.f32 0.0, %v581
    %583 = vdwg.mxu0
    %584 = vmatpush.msra.mxu0 0.0
    %585 = vmatpush.msra.mxu0 0.0
    %586 = vmatpush.msra.mxu0 0.0
    %587 = vmatpush.msra.mxu0 0.0
    %588 = vmatpush.msra.mxu0 0.0
    %589 = vmatpush.msra.mxu0 0.0
    %590 = vmatpush.msra.mxu0 0.0
    %591 = vmatpush.msra.mxu0 0.0
    %592 = vmatpush.msra.mxu0 0.0
    %593 = vmatpush.msra.mxu0 0.0
    %594 = vmatpush.msra.mxu0 0.0
    %595 = vmatpush.msra.mxu0 0.0
    %596 = vmatpush.msra.mxu0 %v40
    %597 = vmatpush.msra.mxu0 %v38
    %598 = vmatpush.msra.mxu0 %v36
    %599 = vmatpush.msra.mxu0 %v34
    %600 = vmatmul.f32.gmra.mxu0 %v562
    %v601 = vpop.f32.mrf.mxu0
    %v602 = vadd.f32 0.0, %v601
    %603 = vdwg.mxu0
    %v604 = vsel %vm120, %v582, %v602
    %v605 = vadd.f32 %v108, %v604
    %v606 = vxor.u32 %v605, 2147483648
    %v607 = vmul.f32 %v606, 1.442695
    %v608 = vpow.pop %v607
    %v609 = vadd.f32 %v608, 1.0
    %v610 = vrcp.pop %v609
    %v611 = vmul.f32 %v609, %v610
    %v612 = vsub.f32 1.0, %v611
    %v613 = vmul.f32 %v610, %v612
    %v614 = vadd.f32 %v610, %v613
    %vm615 = vweird.f32 %v609
    %vm616 = vweird.f32 %v610
    %vm617 = vmor %vm615, %vm616
    %v618 = vsel %vm617, %v610, %v614
    %v619 = vand.u32 2147483647, %v609
    %vm620 = vcmp.eq.f32.partialorder %v619, 8.507059e+37
    %v621 = vand.u32 %v609, 2147483648
    %v622 = vor.u32 1.1754944e-38, %v621
    %v623 = vsel %vm620, %v622, %v618
    %v624 = vmul.f32 1.0, %v623
    %v625 = vadd.f32 %v604, %v188
    %627 = vrot.lane.b32.xlu0 %v625, 64
    %v628 = vpop.permute.xlu0 %627
    %v630 = vmul.f32 %v624, %v628
    %632 = vrot.lane.b32.xlu0 %v630, 64
    %v633 = vpop.permute.xlu0 %632
    %v635 = vadd.f32 %v108, %v633
    %v636 = vtanh.pop %v635
    %v637 = vsub.f32 1.0, %v624
    %639 = vrot.lane.b32.xlu0 %v636, 96
    %v640 = vpop.permute.xlu0 %639
    %v642 = vmul.f32 %v637, %v640
    %v643 = vmul.f32 %v624, %v557
    %v644 = vadd.f32 %v642, %v643
    %v645 = vtanh.pop %v644
    %647 = vrot.lane.b32.xlu0 %v644, 96
    %v648 = vpop.permute.xlu0 %647
    %v649 = vsel %vm121, %v648, 0
    %651 = vmatpush.msra.mxu0 0.0
    %652 = vmatpush.msra.mxu0 0.0
    %653 = vmatpush.msra.mxu0 0.0
    %654 = vmatpush.msra.mxu0 0.0
    %655 = vmatpush.msra.mxu0 0.0
    %656 = vmatpush.msra.mxu0 0.0
    %657 = vmatpush.msra.mxu0 0.0
    %658 = vmatpush.msra.mxu0 0.0
    %659 = vmatpush.msra.mxu0 0.0
    %660 = vmatpush.msra.mxu0 0.0
    %661 = vmatpush.msra.mxu0 0.0
    %662 = vmatpush.msra.mxu0 0.0
    %663 = vmatpush.msra.mxu0 %v39
    %664 = vmatpush.msra.mxu0 %v37
    %665 = vmatpush.msra.mxu0 %v35
    %666 = vmatpush.msra.mxu0 %v33
    %667 = vmatmul.f32.gmra.mxu0 %v649
    %v668 = vpop.f32.mrf.mxu0
    %v669 = vadd.f32 0.0, %v668
    %670 = vdwg.mxu0
    %671 = vmatpush.msra.mxu0 0.0
    %672 = vmatpush.msra.mxu0 0.0
    %673 = vmatpush.msra.mxu0 0.0
    %674 = vmatpush.msra.mxu0 0.0
    %675 = vmatpush.msra.mxu0 0.0
    %676 = vmatpush.msra.mxu0 0.0
    %677 = vmatpush.msra.mxu0 0.0
    %678 = vmatpush.msra.mxu0 0.0
    %679 = vmatpush.msra.mxu0 0.0
    %680 = vmatpush.msra.mxu0 0.0
    %681 = vmatpush.msra.mxu0 0.0
    %682 = vmatpush.msra.mxu0 0.0
    %683 = vmatpush.msra.mxu0 %v40
    %684 = vmatpush.msra.mxu0 %v38
    %685 = vmatpush.msra.mxu0 %v36
    %686 = vmatpush.msra.mxu0 %v34
    %687 = vmatmul.f32.gmra.mxu0 %v649
    %v688 = vpop.f32.mrf.mxu0
    %v689 = vadd.f32 0.0, %v688
    %690 = vdwg.mxu0
    %v691 = vsel %vm120, %v669, %v689
    %v692 = vadd.f32 %v111, %v691
    %v693 = vxor.u32 %v692, 2147483648
    %v694 = vmul.f32 %v693, 1.442695
    %v695 = vpow.pop %v694
    %v696 = vadd.f32 %v695, 1.0
    %v697 = vrcp.pop %v696
    %v698 = vmul.f32 %v696, %v697
    %v699 = vsub.f32 1.0, %v698
    %v700 = vmul.f32 %v697, %v699
    %v701 = vadd.f32 %v697, %v700
    %vm702 = vweird.f32 %v696
    %vm703 = vweird.f32 %v697
    %vm704 = vmor %vm702, %vm703
    %v705 = vsel %vm704, %v697, %v701
    %v706 = vand.u32 2147483647, %v696
    %vm707 = vcmp.eq.f32.partialorder %v706, 8.507059e+37
    %v708 = vand.u32 %v696, 2147483648
    %v709 = vor.u32 1.1754944e-38, %v708
    %v710 = vsel %vm707, %v709, %v705
    %v711 = vmul.f32 1.0, %v710
    %v712 = vadd.f32 %v691, %v188
    %714 = vrot.lane.b32.xlu0 %v712, 64
    %v715 = vpop.permute.xlu0 %714
    %v717 = vmul.f32 %v711, %v715
    %719 = vrot.lane.b32.xlu0 %v717, 64
    %v720 = vpop.permute.xlu0 %719
    %v722 = vadd.f32 %v111, %v720
    %v723 = vtanh.pop %v722
    %v724 = vsub.f32 1.0, %v711
    %726 = vrot.lane.b32.xlu0 %v723, 96
    %v727 = vpop.permute.xlu0 %726
    %v729 = vmul.f32 %v724, %v727
    %v730 = vmul.f32 %v711, %v644
    %v731 = vadd.f32 %v729, %v730
    %v732 = vtanh.pop %v731
    %734 = vrot.lane.b32.xlu0 %v731, 96
    %v735 = vpop.permute.xlu0 %734
    %v736 = vsel %vm121, %v735, 0
    %738 = vmatpush.msra.mxu0 0.0
    %739 = vmatpush.msra.mxu0 0.0
    %740 = vmatpush.msra.mxu0 0.0
    %741 = vmatpush.msra.mxu0 0.0
    %742 = vmatpush.msra.mxu0 0.0
    %743 = vmatpush.msra.mxu0 0.0
    %744 = vmatpush.msra.mxu0 0.0
    %745 = vmatpush.msra.mxu0 0.0
    %746 = vmatpush.msra.mxu0 0.0
    %747 = vmatpush.msra.mxu0 0.0
    %748 = vmatpush.msra.mxu0 0.0
    %749 = vmatpush.msra.mxu0 0.0
    %750 = vmatpush.msra.mxu0 %v39
    %751 = vmatpush.msra.mxu0 %v37
    %752 = vmatpush.msra.mxu0 %v35
    %753 = vmatpush.msra.mxu0 %v33
    %754 = vmatmul.f32.gmra.mxu0 %v736
    %v755 = vpop.f32.mrf.mxu0
    %v756 = vadd.f32 0.0, %v755
    %757 = vdwg.mxu0
    %758 = vmatpush.msra.mxu0 0.0
    %759 = vmatpush.msra.mxu0 0.0
    %760 = vmatpush.msra.mxu0 0.0
    %761 = vmatpush.msra.mxu0 0.0
    %762 = vmatpush.msra.mxu0 0.0
    %763 = vmatpush.msra.mxu0 0.0
    %764 = vmatpush.msra.mxu0 0.0
    %765 = vmatpush.msra.mxu0 0.0
    %766 = vmatpush.msra.mxu0 0.0
    %767 = vmatpush.msra.mxu0 0.0
    %768 = vmatpush.msra.mxu0 0.0
    %769 = vmatpush.msra.mxu0 0.0
    %770 = vmatpush.msra.mxu0 %v40
    %771 = vmatpush.msra.mxu0 %v38
    %772 = vmatpush.msra.mxu0 %v36
    %773 = vmatpush.msra.mxu0 %v34
    %774 = vmatmul.f32.gmra.mxu0 %v736
    %v775 = vpop.f32.mrf.mxu0
    %v776 = vadd.f32 0.0, %v775
    %777 = vdwg.mxu0
    %v778 = vsel %vm120, %v756, %v776
    %v779 = vadd.f32 %v114, %v778
    %v780 = vxor.u32 %v779, 2147483648
    %v781 = vmul.f32 %v780, 1.442695
    %v782 = vpow.pop %v781
    %v783 = vadd.f32 %v782, 1.0
    %v784 = vrcp.pop %v783
    %v785 = vmul.f32 %v783, %v784
    %v786 = vsub.f32 1.0, %v785
    %v787 = vmul.f32 %v784, %v786
    %v788 = vadd.f32 %v784, %v787
    %vm789 = vweird.f32 %v783
    %vm790 = vweird.f32 %v784
    %vm791 = vmor %vm789, %vm790
    %v792 = vsel %vm791, %v784, %v788
    %v793 = vand.u32 2147483647, %v783
    %vm794 = vcmp.eq.f32.partialorder %v793, 8.507059e+37
    %v795 = vand.u32 %v783, 2147483648
    %v796 = vor.u32 1.1754944e-38, %v795
    %v797 = vsel %vm794, %v796, %v792
    %v798 = vmul.f32 1.0, %v797
    %v799 = vadd.f32 %v778, %v188
    %801 = vrot.lane.b32.xlu0 %v799, 64
    %v802 = vpop.permute.xlu0 %801
    %v804 = vmul.f32 %v798, %v802
    %806 = vrot.lane.b32.xlu0 %v804, 64
    %v807 = vpop.permute.xlu0 %806
    %v809 = vadd.f32 %v114, %v807
    %v810 = vtanh.pop %v809
    %v811 = vsub.f32 1.0, %v798
    %813 = vrot.lane.b32.xlu0 %v810, 96
    %v814 = vpop.permute.xlu0 %813
    %v816 = vmul.f32 %v811, %v814
    %v817 = vmul.f32 %v798, %v731
    %v818 = vadd.f32 %v816, %v817
    %v819 = vtanh.pop %v818
    %v820 = vld [vmem:[%s2] sm:$0xff]
    %v821 = vld [vmem:[%s2 + $0x8] sm:$0xff]
    %830 = vrot.lane.b32.xlu0 %v210, 96
    %v831 = vpop.permute.xlu0 %830
    %832 = vrot.lane.b32.xlu0 %v297, 96
    %v833 = vpop.permute.xlu0 %832
    %834 = vrot.lane.b32.xlu0 %v384, 96
    %v835 = vpop.permute.xlu0 %834
    %836 = vrot.lane.b32.xlu0 %v471, 96
    %v837 = vpop.permute.xlu0 %836
    %838 = vrot.lane.b32.xlu0 %v558, 96
    %v839 = vpop.permute.xlu0 %838
    %840 = vrot.lane.b32.xlu0 %v645, 96
    %v841 = vpop.permute.xlu0 %840
    %842 = vrot.lane.b32.xlu0 %v732, 96
    %v843 = vpop.permute.xlu0 %842
    %844 = vrot.lane.b32.xlu0 %v819, 96
    %v845 = vpop.permute.xlu0 %844
    %vm854 = vcmask 523264
    %v856 = vsel %vm854, %v820, 0
    %v859 = vsel %vm854, %v821, 0
    %861 = vmatpush.msra.mxu0 0.0
    %862 = vmatpush.msra.mxu0 0.0
    %863 = vmatpush.msra.mxu0 0.0
    %864 = vmatpush.msra.mxu0 0.0
    %865 = vmatpush.msra.mxu0 0.0
    %866 = vmatpush.msra.mxu0 0.0
    %867 = vmatpush.msra.mxu0 0.0
    %868 = vmatpush.msra.mxu0 0.0
    %869 = vmatpush.msra.mxu0 %v845
    %870 = vmatpush.msra.mxu0 %v843
    %871 = vmatpush.msra.mxu0 %v841
    %872 = vmatpush.msra.mxu0 %v839
    %873 = vmatpush.msra.mxu0 %v837
    %874 = vmatpush.msra.mxu0 %v835
    %875 = vmatpush.msra.mxu0 %v833
    %876 = vmatpush.msra.mxu0 %v831
    %877 = vmatmul.f32.gmra.mxu0 %v856
    %v878 = vpop.f32.mrf.mxu0
    %v879 = vadd.f32 0.0, %v878
    %880 = vmatmul.f32.gmra.mxu0 %v859
    %v881 = vpop.f32.mrf.mxu0
    %v882 = vadd.f32 0.0, %v881
    %883 = vdwg.mxu0
    %885 = vrot.lane.b32.xlu0 %v882, 32
    %v886 = vpop.permute.xlu0 %885
    %v888 = vsel %vm121, %v879, %v886
    %889 = vst.msk [vmem:[#allocation5] sm:$0xff] %vm854, %v888
    // Predicated region
    $region18: #{tpu_custom_call.1} parent=1 // pred_check
      _
    $region19: #{tpu_custom_call.1} parent=1 // pred_check_branch
      %891 = sbr.rel (0) target = $region21
    $region20: #{tpu_custom_call.1} parent=1 // pred_region
      %893 = vsyncadd [#allocation4], 0
      %s895 = sshll.u32 [#allocation5], 4
      %s896 = int_to_ptr.vmem [resolvable:$true] %s895
      %s897 = sshll.u32 %s3, 4
      %s898 = int_to_ptr.hbm [resolvable:$true] %s897
      %900 = dma.vmem_to_hbm [thread:$0]  %s896, 128, %s898, [#allocation4]
    $region21: #{tpu_custom_call.1} parent=1 // pred_fallthru
      _
    // Predicated region
    $region22: #{tpu_custom_call.1} parent=1 // pred_check
      _
    $region23: #{tpu_custom_call.1} parent=1 // pred_check_branch
      %902 = sbr.rel (0) target = $region25
    $region24: #{tpu_custom_call.1} parent=1 // pred_region
      %904 = dma.done [#allocation4], 128
    $region25: #{tpu_custom_call.1} parent=1 // pred_fallthru
      _
    %905 = vsyncpa [#allocation3], 1
    %906 = vsyncpa [#allocation4], 1

</llo_original>
